<compile_context>
chip_gen: v7x
topology: tpu7x:2x2x1
jax: 0.10.0
libtpu: 0.0.40
codegen_flags: <defaults>
</compile_context>

<pallas_src>
import functools
import inspect

import jax
import jax.numpy as jnp
from jax import lax
from jax.experimental import pallas as pl
from jax.experimental.pallas import tpu as pltpu

_LANE = 128


def _round_up(v, m):
    return (v + m - 1) // m * m


@functools.lru_cache(maxsize=None)
def _vmem_caps():
    """(vmem_limit_bytes, resident_budget_bytes), generation-aware."""
    cap = None
    try:
        info = pltpu.get_tpu_info()
        cap = (getattr(info, "vmem_capacity_bytes", None)
               or getattr(info, "vmem_size_bytes", None)
               or getattr(info, "vmem_bytes", None))
    except Exception:
        cap = None
    if not cap:
        cap = 64 * 1024 * 1024          # conservative fallback: v7x physical VMEM
    vmem_limit = int(cap * 0.85)        # headroom for compiler-internal scratch
    resident_budget = int(cap * 0.70)   # budget for the resident-pre_sup path
    return vmem_limit, resident_budget


@functools.lru_cache(maxsize=None)
def _single_buffer_ok():
    """Probe whether pipeline_mode=pl.Buffered(1) is accepted (single-buffering
    an invariant block). Falls back to default double buffering if not."""
    try:
        if "pipeline_mode" not in inspect.signature(pl.BlockSpec).parameters:
            return False

        def _copy(x_ref, o_ref):
            o_ref[...] = x_ref[...]

        f = pl.pallas_call(
            _copy,
            out_shape=jax.ShapeDtypeStruct((16, _LANE), jnp.float32),
            grid=(2,),
            in_specs=[pl.BlockSpec((8, _LANE), lambda i: (0, 0),
                                   pipeline_mode=pl.Buffered(1))],
            out_specs=pl.BlockSpec((8, _LANE), lambda i: (i, 0)),
        )
        jax.block_until_ready(f(jnp.zeros((8, _LANE), jnp.float32)))
        return True
    except Exception:
        return False


def _invariant_spec(block_shape, index_map, single_buffer):
    """Spec for a block whose index_map is constant: fetched once; single-buffer
    it when supported (double buffering an invariant block only costs VMEM)."""
    if single_buffer:
        return pl.BlockSpec(block_shape, index_map, pipeline_mode=pl.Buffered(1))
    return pl.BlockSpec(block_shape, index_map)


def _row_tile(n):
    if n >= 1024:
        return 256
    if n >= 256:
        return 128
    if n < 16:
        return n
    # small graphs: keep >= 2 row tiles so both v7x TensorCores get work
    return max(8, _round_up(-(-n // 2), 8))


# ---------------------------------------------------------------------------
# Pass 1: pre_sup = x @ W   (computed exactly once; x/W padded, never A)
# ---------------------------------------------------------------------------
def _presup_kernel(x_ref, w_ref, p_ref):
    # f32 MXU accumulation; one cast at the store (possibly down to bf16 so
    # pass 2 holds/reads half the bytes).
    acc = jnp.dot(x_ref[...], w_ref[...], preferred_element_type=jnp.float32)
    p_ref[...] = acc.astype(p_ref.dtype)


# ---------------------------------------------------------------------------
# Pass 2: y = relu(A @ pre_sup); one (row, k) step per grid point.
# ---------------------------------------------------------------------------
def _agg_relu_kernel(a_ref, p_ref, y_ref, *, tk, n_valid, dot_dtype, p_resident):
    k = pl.program_id(1)

    @pl.when(k == 0)
    def _init():
        y_ref[...] = jnp.zeros_like(y_ref)

    a = a_ref[...]
    if n_valid is not None:
        # Ragged contraction tail: zero out-of-bounds columns of the A tile
        # (pre_sup's padded rows are exact zeros, so the tail contributes 0).
        col = k * tk + lax.broadcasted_iota(jnp.int32, a.shape, 1)
        a = jnp.where(col < n_valid, a, 0.0)
    if a.dtype != dot_dtype:
        a = a.astype(dot_dtype)          # in-kernel cast; no HBM copy/cast of A

    if p_resident:
        off = pl.multiple_of(k * tk, tk)
        p = p_ref[pl.ds(off, tk), :]     # slice the resident pre_sup
    else:
        p = p_ref[...]

    # Accumulate directly into the f32 output block (resident across k).
    y_ref[...] += jnp.dot(a, p, preferred_element_type=jnp.float32)

    @pl.when(k == pl.num_programs(1) - 1)
    def _finalize():
        y_ref[...] = jnp.maximum(y_ref[...], 0.0)


def gcn_edge_forward(x, A, W, *, compute_dtype=jnp.float32, force_tiled=False, tk=None):
    """y, A = GCNEdge.forward(x, A) with act=ReLU, no dropout, no bias.

    compute_dtype: storage dtype of pre_sup and MXU input dtype of the
      A @ pre_sup contraction (accumulation is always f32).  bf16 halves
      pre_sup VMEM/HBM traffic and uses the fast MXU path on v6e/v7x.
    """
    N, D = x.shape
    Dw, F = W.shape
    assert Dw == D and A.shape == (N, N)

    out_dtype = x.dtype
    cd = jnp.dtype(compute_dtype)
    vmem_limit, resident_budget = _vmem_caps()
    single_buf = _single_buffer_ok()

    F_pad = _round_up(F, _LANE)                 # lane-dense pre_sup / y columns
    tm = _row_tile(N)                           # row tile of A / y

    # contraction tile over the node axis (never larger than N)
    if tk is not None:
        assert tk % _LANE == 0
        tk_eff = tk
    elif N < _LANE:
        tk_eff = N                              # single full-width k block
    else:
        tk_eff = min(512, (N // _LANE) * _LANE)
    nk = -(-N // tk_eff)
    Np = nk * tk_eff                            # pre_sup rows, padded so the
                                                # in-kernel slice stays in bounds
    n_valid = N if (N % tk_eff) else None       # ragged tail -> in-kernel mask

    # ---- pass 1: pre_sup = x @ W  (pad x/W, which are tiny next to A) -----
    xp = x if Np == N else jnp.pad(x, ((0, Np - N), (0, 0)))
    Wp = W if F_pad == F else jnp.pad(W, ((0, 0), (0, F_pad - F)))

    if Np % 256 == 0 and Np >= 1024:
        tp = 256
    elif Np % 128 == 0 and Np >= 256:
        tp = 128                                # >= 2 row tiles for v7x megacore
    else:
        tp = Np                                 # tiny graphs: single full tile

    pre_sup = pl.pallas_call(
        _presup_kernel,
        out_shape=jax.ShapeDtypeStruct((Np, F_pad), cd),
        grid=(Np // tp,),
        in_specs=[
            pl.BlockSpec((tp, D), lambda i: (i, 0)),
            _invariant_spec((D, F_pad), lambda i: (0, 0), single_buf),  # W invariant
        ],
        out_specs=pl.BlockSpec((tp, F_pad), lambda i: (i, 0)),
        compiler_params=pltpu.CompilerParams(
            dimension_semantics=("parallel",),
            vmem_limit_bytes=vmem_limit,
        ),
    )(xp, Wp)

    # ---- pass 2: y = relu(A @ pre_sup) -------------------------------------
    a_bytes = jnp.dtype(A.dtype).itemsize
    p_bytes = cd.itemsize
    resident_need = (Np * F_pad * p_bytes * (1 if single_buf else 2)   # pre_sup
                     + tm * tk_eff * a_bytes * 2                       # A tile
                     + tm * F_pad * 4 * 2)                             # f32 out block
    use_resident = (resident_need <= resident_budget) and not force_tiled

    if use_resident:
        p_spec = _invariant_spec((Np, F_pad), lambda i, k: (0, 0), single_buf)
    else:
        # Huge N*F fallback: pre_sup is k-tiled (re-fetched once per row tile),
        # so use the largest row tile the VMEM budget allows to cut re-reads.
        for tm_big in (512, 256):
            need = (tm_big * tk_eff * a_bytes * 2 + tk_eff * F_pad * p_bytes * 2
                    + tm_big * F_pad * 4 * 2)
            if tm_big > tm and N >= 2 * tm_big and need <= resident_budget:
                tm = tm_big
                break
        p_spec = pl.BlockSpec((tk_eff, F_pad), lambda i, k: (k, 0))

    kern = functools.partial(_agg_relu_kernel, tk=tk_eff, n_valid=n_valid,
                             dot_dtype=cd, p_resident=use_resident)

    y_pad = pl.pallas_call(
        kern,
        out_shape=jax.ShapeDtypeStruct((N, F_pad), jnp.float32),
        grid=(pl.cdiv(N, tm), nk),              # reduction axis last
        in_specs=[
            pl.BlockSpec((tm, tk_eff), lambda i, k: (i, k)),  # A straight from HBM
            p_spec,
        ],
        out_specs=pl.BlockSpec((tm, F_pad), lambda i, k: (i, 0)),
        compiler_params=pltpu.CompilerParams(
            dimension_semantics=("parallel", "arbitrary"),
            vmem_limit_bytes=vmem_limit,
        ),
    )(A, pre_sup)

    if F_pad != F:
        y_pad = y_pad[:, :F]
    y = y_pad if y_pad.dtype == out_dtype else y_pad.astype(out_dtype)
    # Module returns (y, A); A is untouched.
    return y, A


def glorot_init(key, shape):
    """Glorot & Bengio uniform init, matching the PyTorch module."""
    fan_in, fan_out = shape
    init_range = jnp.sqrt(6.0 / (fan_in + fan_out))
    return jax.random.uniform(key, shape, jnp.float32, -init_range, init_range)


def _reference_forward(x, A, W):
    pre = jnp.dot(x, W, precision=jax.lax.Precision.HIGHEST)
    y = jnp.dot(A, pre, precision=jax.lax.Precision.HIGHEST)
    return jnp.maximum(y, 0.0)


if __name__ == "__main__":
    # N graph nodes, input_dim D, output_dim F.
    N, D, F = 256, 64, 128

    key = jax.random.PRNGKey(0)
    kx, ka, kw = jax.random.split(key, 3)

    x = jax.random.normal(kx, (N, D), dtype=jnp.float32)
    A_raw = jax.random.uniform(ka, (N, N), dtype=jnp.float32)
    A = A_raw / jnp.sum(A_raw, axis=-1, keepdims=True)   # row-normalized adjacency
    W = glorot_init(kw, (D, F))

    y_ref = _reference_forward(x, A, W)

    # 1) Default: f32, pre_sup resident in VMEM, single k step.
    y, A_out = gcn_edge_forward(x, A, W)
    jax.block_until_ready((y, A_out))
    assert y.shape == (N, F)
    assert jnp.allclose(y, y_ref, atol=1e-3, rtol=1e-3)
    assert jnp.array_equal(A_out, A)

    # 2) Multi-step contraction (resident pre_sup, k-tiled A stripe).
    y_t, _ = gcn_edge_forward(x, A, W, tk=128)
    jax.block_until_ready(y_t)
    assert jnp.allclose(y_t, y_ref, atol=1e-3, rtol=1e-3)

    # 3) Fully tiled fallback path (pre_sup k-tiled too).
    y_ft, _ = gcn_edge_forward(x, A, W, force_tiled=True, tk=128)
    jax.block_until_ready(y_ft)
    assert jnp.allclose(y_ft, y_ref, atol=1e-3, rtol=1e-3)

    # 4) Unaligned N / F exercise the in-kernel ragged-tail masking (A never padded).
    N2, F2 = 200, 100
    x2 = jax.random.normal(kx, (N2, D), dtype=jnp.float32)
    A2_raw = jax.random.uniform(ka, (N2, N2), dtype=jnp.float32)
    A2 = A2_raw / jnp.sum(A2_raw, axis=-1, keepdims=True)
    W2 = glorot_init(kw, (D, F2))
    y2_ref = _reference_forward(x2, A2, W2)
    y2, _ = gcn_edge_forward(x2, A2, W2)
    jax.block_until_ready(y2)
    assert y2.shape == (N2, F2)
    assert jnp.allclose(y2, y2_ref, atol=1e-3, rtol=1e-3)
    y2_ft, _ = gcn_edge_forward(x2, A2, W2, force_tiled=True, tk=128)
    jax.block_until_ready(y2_ft)
    assert jnp.allclose(y2_ft, y2_ref, atol=1e-3, rtol=1e-3)

    # 5) bf16 MXU path: pre_sup stored bf16, A cast to bf16 in-kernel, f32 accumulation.
    y_bf, _ = gcn_edge_forward(x, A, W, compute_dtype=jnp.bfloat16)
    jax.block_until_ready(y_bf)
    assert jnp.allclose(y_bf, y_ref, atol=5e-2, rtol=5e-2)

    print("KERNEL_OK")
</pallas_src>

<mosaic_0001>
module attributes {stable_mosaic.version = 11 : i64} {
  func.func @_copy(%arg0: i32, %arg1: memref<8x128xf32, #tpu.memory_space<vmem>>, %arg2: memref<8x128xf32, #tpu.memory_space<vmem>>) attributes {dimension_semantics = [#tpu.dimension_semantics<arbitrary>], iteration_bounds = array<i64: 2>, scalar_prefetch = 0 : i64, scratch_operands = 0 : i64, tpu.core_type = #tpu.core_type<tc>, window_params = [{pipeline_mode = #tpu.pipeline_mode<synchronous>, transform_indices = @transform_0, window_bounds = array<i64: 8, 128>}, {transform_indices = @transform_1, window_bounds = array<i64: 8, 128>}]} {
    %c0 = arith.constant 0 : index
    %c0_0 = arith.constant 0 : index
    %0 = vector.load %arg1[%c0, %c0_0] : memref<8x128xf32, #tpu.memory_space<vmem>>, vector<8x128xf32>
    %c0_1 = arith.constant 0 : index
    %c0_2 = arith.constant 0 : index
    %1 = vector.load %arg2[%c0_1, %c0_2] : memref<8x128xf32, #tpu.memory_space<vmem>>, vector<8x128xf32>
    tpu.vector_store %arg2[%c0_1, %c0_2], %0 {strides = array<i32>} : memref<8x128xf32, #tpu.memory_space<vmem>>, vector<8x128xf32>,
    return
  }
  func.func @transform_0(%arg0: i32) -> (i32, i32) {
    %c0_i32 = arith.constant 0 : i32
    %c0_i32_0 = arith.constant 0 : i32
    %c0_i32_1 = arith.constant 0 : i32
    return %c0_i32, %c0_i32_0 : i32, i32
  }
  func.func @transform_1(%arg0: i32) -> (i32, i32) {
    %c0_i32 = arith.constant 0 : i32
    %c0_i32_0 = arith.constant 0 : i32
    return %arg0, %c0_i32 : i32, i32
  }
}

module attributes {stable_mosaic.version = 11 : i64} {
  func.func @_presup_kernel(%arg0: i32, %arg1: memref<128x64xf32, #tpu.memory_space<vmem>>, %arg2: memref<64x128xf32, #tpu.memory_space<vmem>>, %arg3: memref<128x128xf32, #tpu.memory_space<vmem>>) attributes {dimension_semantics = [#tpu.dimension_semantics<parallel>], iteration_bounds = array<i64: 2>, scalar_prefetch = 0 : i64, scratch_operands = 0 : i64, tpu.core_type = #tpu.core_type<tc>, window_params = [{transform_indices = @transform_0, window_bounds = array<i64: 128, 64>}, {pipeline_mode = #tpu.pipeline_mode<synchronous>, transform_indices = @transform_1, window_bounds = array<i64: 64, 128>}, {transform_indices = @transform_2, window_bounds = array<i64: 128, 128>}]} {
    %c0 = arith.constant 0 : index
    %c0_0 = arith.constant 0 : index
    %0 = vector.load %arg1[%c0, %c0_0] : memref<128x64xf32, #tpu.memory_space<vmem>>, vector<128x64xf32>
    %c0_1 = arith.constant 0 : index
    %c0_2 = arith.constant 0 : index
    %1 = vector.load %arg2[%c0_1, %c0_2] : memref<64x128xf32, #tpu.memory_space<vmem>>, vector<64x128xf32>
    %cst = arith.constant dense<0.000000e+00> : vector<128x128xf32>
    %2 = tpu.matmul %0, %1, %cst {dimension_numbers = #tpu.dot_dimension_numbers<[1], [0], [0], [1], [0, 0, 1, 1], [], []>} : vector<128x64xf32>, vector<64x128xf32>, vector<128x128xf32> -> vector<128x128xf32>
    %c0_3 = arith.constant 0 : index
    %c0_4 = arith.constant 0 : index
    %3 = vector.load %arg3[%c0_3, %c0_4] : memref<128x128xf32, #tpu.memory_space<vmem>>, vector<128x128xf32>
    tpu.vector_store %arg3[%c0_3, %c0_4], %2 {strides = array<i32>} : memref<128x128xf32, #tpu.memory_space<vmem>>, vector<128x128xf32>,
    return
  }
  func.func @transform_0(%arg0: i32) -> (i32, i32) {
    %c0_i32 = arith.constant 0 : i32
    %c0_i32_0 = arith.constant 0 : i32
    return %arg0, %c0_i32 : i32, i32
  }
  func.func @transform_1(%arg0: i32) -> (i32, i32) {
    %c0_i32 = arith.constant 0 : i32
    %c0_i32_0 = arith.constant 0 : i32
    %c0_i32_1 = arith.constant 0 : i32
    return %c0_i32, %c0_i32_0 : i32, i32
  }
  func.func @transform_2(%arg0: i32) -> (i32, i32) {
    %c0_i32 = arith.constant 0 : i32
    %c0_i32_0 = arith.constant 0 : i32
    return %arg0, %c0_i32 : i32, i32
  }
}

</mosaic_0001>

<llo_original>
// kernel: tpu_custom_call.1
$region0: #{tpu_custom_call.1}
  #allocation0 [shape = 'u32[]', space=smem, size = 0x4, offset = 0x4, fixed_abs, tag = 'smem constant byte address 0x4 - core index']
  #allocation1 [shape = 'u32[144,128]{1,0:T(1,128)}', space=vmem, size = 0x12000, scoped, tag = 'internal scratch']
  %s0 = inlined_call_operand.hbm [shape: f32[8,128], index: 0, kind: input, shape index: {}]
  %s1 = inlined_call_operand.hbm [shape: f32[16,128], index: 1, kind: output, shape index: {}]
  %s2 = sld [smem:[#allocation0]]
  $region41: #{tpu_custom_call.1} parent=0
    _
  %s4 = ssub.s32 1, %s2
  %s5 = scalar_select 0, %s4, %s2
  $region1: #{tpu_custom_call.1} parent=0
    #allocation2 [shape = 'u8[4096]{0}', space=vmem, size = 0x1000, scoped, tag = 'input window, operand 0, single buffered']
    #allocation3 [shape = 's32[2]{0}', space=sflag, size = 0x8, scoped, tag = 'scoped memory for tpu_custom_call.1']
    #allocation4 [shape = 's32[2]{0}', space=sflag, size = 0x8, scoped, tag = 'scoped memory for tpu_custom_call.1']
    #allocation5 [shape = 'u8[8192]{0}', space=vmem, size = 0x2000, scoped, tag = 'output window, operand 0']
    %6 = vsyncpa [#allocation3], 0
    %7 = vsyncpa [#allocation4], 0
    %s8 = scalar_lea.sflag [#allocation4], 1
    %9 = vsyncpa %s8, 0
    loop: start=0, step=1, limit=4
    $region2: #{tpu_custom_call.1} parent=1 // loop_pre_header
      _
    $region3: #{tpu_custom_call.1} parent=1 // loop_header
      %s11 = sphi 0, %s15
      %p12 = scmp.ge.s32.totalorder %s11, 4
      %s19 = sphi 0, %s19
      %s21 = sphi 0, %s19
      %s22 = sphi 0, %s21
      %s36 = sphi 0, %s22
      %s42 = sphi 0, %s44
      %s45 = sphi 0, %s42
      %s46 = sphi 0, %s45
      %s62 = sphi 0, %s46
    $region4: #{tpu_custom_call.1} parent=1 // loop_header_branch
      %14 = sbr.rel (%p12) target = $region8
    $region5: #{tpu_custom_call.1} parent=1 // loop_body
      %s16 = ssub.s32 %s11, 1
      %s17 = ssub.s32 %s11, 2
      %s18 = sadd.s32 %s11, 1
      %s20 = sadd.s32 %s19, 1
      %p23 = scmp.eq.s32.totalorder %s11, 1
      %p24 = scmp.ne.s32.totalorder %s19, %s21
      %p25 = scmp.eq.s32.totalorder %s11, 0
      %p26 = por %p24, %p25
      %p27 = scmp.ne.s32.totalorder %s19, %s21
      %p28 = scmp.eq.s32.totalorder %s16, 1
      %p29 = por %p27, %p28
      %p30 = scmp.ne.s32.totalorder %s21, %s22
      %p31 = scmp.eq.s32.totalorder %s16, 0
      %p32 = por %p30, %p31
      %p33 = scmp.ne.s32.totalorder %s21, %s22
      %p34 = scmp.eq.s32.totalorder %s17, 1
      %p35 = por %p33, %p34
      %p37 = scmp.ne.s32.totalorder %s22, %s36
      %p38 = scmp.eq.s32.totalorder %s17, 0
      %p39 = por %p37, %p38
      %s40 = ssub.s32 %s11, %s18
      %p41 = scmp.eq.s32.totalorder %s40, 0
      %s43 = sadd.s32 %s42, 1
      %s44 = scalar_select %p41, %s42, %s43
      %p47 = pneg %p41
      %p48 = scmp.eq.s32.totalorder %s11, 1
      %p49 = por %p47, %p48
      %p50 = scmp.ne.s32.totalorder %s42, %s45
      %p51 = scmp.eq.s32.totalorder %s11, 0
      %p52 = por %p50, %p51
      %p53 = scmp.ne.s32.totalorder %s42, %s45
      %p54 = scmp.eq.s32.totalorder %s16, 1
      %p55 = por %p53, %p54
      %p56 = scmp.ne.s32.totalorder %s45, %s46
      %p57 = scmp.eq.s32.totalorder %s16, 0
      %p58 = por %p56, %p57
      %p59 = scmp.ne.s32.totalorder %s45, %s46
      %p60 = scmp.eq.s32.totalorder %s17, 1
      %p61 = por %p59, %p60
      %p63 = scmp.ne.s32.totalorder %s46, %s62
      %p64 = scmp.eq.s32.totalorder %s17, 0
      %p65 = por %p63, %p64
      %p66 = scmp.le.s32.totalorder 1, %s11
      %p67 = scmp.lt.s32.totalorder %s11, 3
      %p68 = pnand %p66, %p67
      %p69 = pneg %p68
      // Predicated region
      $region9: #{tpu_custom_call.1} parent=5 // pred_check
        _
      $region10: #{tpu_custom_call.1} parent=5 // pred_check_branch
        %71 = sbr.rel (%p68) target = $region12
      $region11: #{tpu_custom_call.1} parent=5 // pred_region
        %s72 = ssub.s32 %s11, 1
        // Predicated region
        $region13: #{tpu_custom_call.1} parent=11 // pred_check
          %p73 = pneg %p32
        $region14: #{tpu_custom_call.1} parent=11 // pred_check_branch
          %75 = sbr.rel (%p73) target = $region16
        $region15: #{tpu_custom_call.1} parent=11 // pred_region
          %s77 = ssub.s32 128, 128
          %78 = vsyncadd [#allocation3], %s77
          %s80 = sshll.u32 [#allocation2], 4
          %s81 = int_to_ptr.vmem [resolvable:$true] %s80
          %83 = dma.hbm_to_vmem [thread:$0]  %s0, 128, %s81, [#allocation3]
        $region16: #{tpu_custom_call.1} parent=11 // pred_fallthru
          _
      $region12: #{tpu_custom_call.1} parent=5 // pred_fallthru
        _
      %p84 = scmp.lt.s32.totalorder %s11, 2
      // Predicated region
      $region17: #{tpu_custom_call.1} parent=5 // pred_check
        %p85 = pneg %p84
      $region18: #{tpu_custom_call.1} parent=5 // pred_check_branch
        %87 = sbr.rel (%p85) target = $region20
      $region19: #{tpu_custom_call.1} parent=5 // pred_region
        _
      $region20: #{tpu_custom_call.1} parent=5 // pred_fallthru
        _
      %p88 = scmp.le.s32.totalorder 1, %s11
      %p89 = scmp.lt.s32.totalorder %s11, 3
      %p90 = pnand %p88, %p89
      %p91 = pneg %p90
      // Predicated region
      $region21: #{tpu_custom_call.1} parent=5 // pred_check
        _
      $region22: #{tpu_custom_call.1} parent=5 // pred_check_branch
        %93 = sbr.rel (%p90) target = $region24
      $region23: #{tpu_custom_call.1} parent=5 // pred_region
        %s94 = ssub.s32 %s11, 1
        // Predicated region
        $region25: #{tpu_custom_call.1} parent=23 // pred_check
          %p95 = pneg %p32
        $region26: #{tpu_custom_call.1} parent=23 // pred_check_branch
          %97 = sbr.rel (%p95) target = $region28
        $region27: #{tpu_custom_call.1} parent=23 // pred_region
          %98 = dma.done [#allocation3], 128
        $region28: #{tpu_custom_call.1} parent=23 // pred_fallthru
          _
        %p99 = pneg %p32
        %p100 = pneg %p29
        %p101 = pneg %p58
        %p102 = pneg %p55
        %s103 = sand.u32 %s45, 1
        %s104 = scalar_lea.sflag [#allocation4], %s103
        %s105 = sand.u32 %s45, 1
        %s106 = smul.addr %s105, 8
        %s107 = scalar_lea.vmem [#allocation5], %s106
        %v108 = vld [vmem:[#allocation2] sm:$0xff]
        %109 = vst [vmem:[%s107] sm:$0xff] %v108
        %s110 = sand.u32 %s45, 1
        %s111 = scalar_lea.sflag [#allocation4], %s110
        %s112 = sand.u32 %s45, 1
        %s113 = smul.addr %s112, 8
        %s114 = scalar_lea.vmem [#allocation5], %s113
        // Predicated region
        $region29: #{tpu_custom_call.1} parent=23 // pred_check
          %p115 = pneg %p55
        $region30: #{tpu_custom_call.1} parent=23 // pred_check_branch
          %117 = sbr.rel (%p115) target = $region32
        $region31: #{tpu_custom_call.1} parent=23 // pred_region
          %s119 = ssub.s32 128, 128
          %120 = vsyncadd %s111, %s119
          %s121 = smul.addr %s16, 128
          %s122 = scalar_lea.hbm %s1, %s121
          %s124 = sshll.u32 %s114, 4
          %s125 = int_to_ptr.vmem [resolvable:$true] %s124
          %127 = dma.vmem_to_hbm [thread:$0]  %s125, 128, %s122, %s111
        $region32: #{tpu_custom_call.1} parent=23 // pred_fallthru
          _
      $region24: #{tpu_custom_call.1} parent=5 // pred_fallthru
        _
      %p128 = scmp.le.s32.totalorder 2, %s11
      // Predicated region
      $region33: #{tpu_custom_call.1} parent=5 // pred_check
        %p129 = pneg %p128
      $region34: #{tpu_custom_call.1} parent=5 // pred_check_branch
        %131 = sbr.rel (%p129) target = $region36
      $region35: #{tpu_custom_call.1} parent=5 // pred_region
        %s132 = ssub.s32 %s11, 2
        // Predicated region
        $region37: #{tpu_custom_call.1} parent=35 // pred_check
          %p133 = pneg %p61
        $region38: #{tpu_custom_call.1} parent=35 // pred_check_branch
          %135 = sbr.rel (%p133) target = $region40
        $region39: #{tpu_custom_call.1} parent=35 // pred_region
          %s136 = sand.u32 %s46, 1
          %s137 = scalar_lea.sflag [#allocation4], %s136
          %s138 = sand.u32 %s46, 1
          %s139 = smul.addr %s138, 8
          %s140 = scalar_lea.vmem [#allocation5], %s139
          %141 = dma.done %s137, 128
        $region40: #{tpu_custom_call.1} parent=35 // pred_fallthru
          _
      $region36: #{tpu_custom_call.1} parent=5 // pred_fallthru
        _
    $region6: #{tpu_custom_call.1} parent=1 // loop_footer
      %s15 = sadd.s32 1, %s11
    $region7: #{tpu_custom_call.1} parent=1 // loop_footer_branch
      %10 = sbr.rel target = $region3
    $region8: #{tpu_custom_call.1} parent=1 // loop_exit
      _
    %142 = vsyncpa [#allocation3], 1
    %s143 = scalar_lea.sflag [#allocation3], 1
    %144 = vsyncpa %s143, 1
    %145 = vsyncpa [#allocation4], 1
    %s146 = scalar_lea.sflag [#allocation4], 1
    %147 = vsyncpa %s146, 1

// kernel: tpu_custom_call.1
$region0: #{tpu_custom_call.1}
  #allocation0 [shape = 'u32[]', space=smem, size = 0x4, offset = 0x4, fixed_abs, tag = 'smem constant byte address 0x4 - core index']
  #allocation1 [shape = 'u32[144,128]{1,0:T(1,128)}', space=vmem, size = 0x12000, scoped, tag = 'internal scratch']
  %s0 = inlined_call_operand.vmem [shape: f32[256,64], index: 0, kind: input, shape index: {}]
  %s1 = inlined_call_operand.vmem [shape: f32[64,128], index: 1, kind: input, shape index: {}]
  %s2 = inlined_call_operand.hbm [shape: f32[256,128], index: 2, kind: output, shape index: {}]
  %s3 = sld [smem:[#allocation0]]
  $region41: #{tpu_custom_call.1} parent=0
    _
  %s5 = ssub.s32 1, %s3
  %s6 = scalar_select 0, %s5, %s3
  $region1: #{tpu_custom_call.1} parent=0
    #allocation2 [shape = 'u8[131072]{0}', space=vmem, size = 0x20000, scoped, tag = 'output window, operand 0']
    #allocation3 [shape = 's32[2]{0}', space=sflag, size = 0x8, scoped, tag = 'scoped memory for tpu_custom_call.1']
    %7 = vsyncpa [#allocation3], 0
    %s8 = scalar_lea.sflag [#allocation3], 1
    %9 = vsyncpa %s8, 0
    loop: start=0, step=1, limit=4
    $region2: #{tpu_custom_call.1} parent=1 // loop_pre_header
      _
    $region3: #{tpu_custom_call.1} parent=1 // loop_header
      %s11 = sphi 0, %s15
      %p12 = scmp.ge.s32.totalorder %s11, 4
      %s21 = sphi 0, %s23
      %s24 = sphi 0, %s21
      %s25 = sphi 0, %s24
      %s41 = sphi 0, %s25
      %s45 = sphi 0, %s45
      %s47 = sphi 0, %s45
      %s48 = sphi 0, %s47
      %s62 = sphi 0, %s48
      %s68 = sphi 0, %s70
      %s71 = sphi 0, %s68
      %s72 = sphi 0, %s71
      %s88 = sphi 0, %s72
    $region4: #{tpu_custom_call.1} parent=1 // loop_header_branch
      %14 = sbr.rel (%p12) target = $region8
    $region5: #{tpu_custom_call.1} parent=1 // loop_body
      %s16 = ssub.s32 %s11, 1
      %s17 = ssub.s32 %s11, 2
      %s18 = sadd.s32 %s11, 1
      %s19 = ssub.s32 %s11, %s18
      %p20 = scmp.eq.s32.totalorder %s19, 0
      %s22 = sadd.s32 %s21, 1
      %s23 = scalar_select %p20, %s21, %s22
      %p26 = pneg %p20
      %p27 = scmp.eq.s32.totalorder %s11, 1
      %p28 = por %p26, %p27
      %p29 = scmp.ne.s32.totalorder %s21, %s24
      %p30 = scmp.eq.s32.totalorder %s11, 0
      %p31 = por %p29, %p30
      %p32 = scmp.ne.s32.totalorder %s21, %s24
      %p33 = scmp.eq.s32.totalorder %s16, 1
      %p34 = por %p32, %p33
      %p35 = scmp.ne.s32.totalorder %s24, %s25
      %p36 = scmp.eq.s32.totalorder %s16, 0
      %p37 = por %p35, %p36
      %p38 = scmp.ne.s32.totalorder %s24, %s25
      %p39 = scmp.eq.s32.totalorder %s17, 1
      %p40 = por %p38, %p39
      %p42 = scmp.ne.s32.totalorder %s25, %s41
      %p43 = scmp.eq.s32.totalorder %s17, 0
      %p44 = por %p42, %p43
      %s46 = sadd.s32 %s45, 1
      %p49 = scmp.eq.s32.totalorder %s11, 1
      %p50 = scmp.ne.s32.totalorder %s45, %s47
      %p51 = scmp.eq.s32.totalorder %s11, 0
      %p52 = por %p50, %p51
      %p53 = scmp.ne.s32.totalorder %s45, %s47
      %p54 = scmp.eq.s32.totalorder %s16, 1
      %p55 = por %p53, %p54
      %p56 = scmp.ne.s32.totalorder %s47, %s48
      %p57 = scmp.eq.s32.totalorder %s16, 0
      %p58 = por %p56, %p57
      %p59 = scmp.ne.s32.totalorder %s47, %s48
      %p60 = scmp.eq.s32.totalorder %s17, 1
      %p61 = por %p59, %p60
      %p63 = scmp.ne.s32.totalorder %s48, %s62
      %p64 = scmp.eq.s32.totalorder %s17, 0
      %p65 = por %p63, %p64
      %s66 = ssub.s32 %s11, %s18
      %p67 = scmp.eq.s32.totalorder %s66, 0
      %s69 = sadd.s32 %s68, 1
      %s70 = scalar_select %p67, %s68, %s69
      %p73 = pneg %p67
      %p74 = scmp.eq.s32.totalorder %s11, 1
      %p75 = por %p73, %p74
      %p76 = scmp.ne.s32.totalorder %s68, %s71
      %p77 = scmp.eq.s32.totalorder %s11, 0
      %p78 = por %p76, %p77
      %p79 = scmp.ne.s32.totalorder %s68, %s71
      %p80 = scmp.eq.s32.totalorder %s16, 1
      %p81 = por %p79, %p80
      %p82 = scmp.ne.s32.totalorder %s71, %s72
      %p83 = scmp.eq.s32.totalorder %s16, 0
      %p84 = por %p82, %p83
      %p85 = scmp.ne.s32.totalorder %s71, %s72
      %p86 = scmp.eq.s32.totalorder %s17, 1
      %p87 = por %p85, %p86
      %p89 = scmp.ne.s32.totalorder %s72, %s88
      %p90 = scmp.eq.s32.totalorder %s17, 0
      %p91 = por %p89, %p90
      %p92 = scmp.le.s32.totalorder 1, %s11
      %p93 = scmp.lt.s32.totalorder %s11, 3
      %p94 = pnand %p92, %p93
      %p95 = pneg %p94
      // Predicated region
      $region9: #{tpu_custom_call.1} parent=5 // pred_check
        _
      $region10: #{tpu_custom_call.1} parent=5 // pred_check_branch
        %97 = sbr.rel (%p94) target = $region12
      $region11: #{tpu_custom_call.1} parent=5 // pred_region
        %s98 = ssub.s32 %s11, 1
        // Predicated region
        $region13: #{tpu_custom_call.1} parent=11 // pred_check
          %p99 = pneg %p58
        $region14: #{tpu_custom_call.1} parent=11 // pred_check_branch
          %101 = sbr.rel (%p99) target = $region16
        $region15: #{tpu_custom_call.1} parent=11 // pred_region
          _
        $region16: #{tpu_custom_call.1} parent=11 // pred_fallthru
          _
      $region12: #{tpu_custom_call.1} parent=5 // pred_fallthru
        _
      %p102 = scmp.lt.s32.totalorder %s11, 2
      // Predicated region
      $region17: #{tpu_custom_call.1} parent=5 // pred_check
        %p103 = pneg %p102
      $region18: #{tpu_custom_call.1} parent=5 // pred_check_branch
        %105 = sbr.rel (%p103) target = $region20
      $region19: #{tpu_custom_call.1} parent=5 // pred_region
        // Predicated region
        $region21: #{tpu_custom_call.1} parent=19 // pred_check
          %p106 = pneg %p31
        $region22: #{tpu_custom_call.1} parent=19 // pred_check_branch
          %108 = sbr.rel (%p106) target = $region24
        $region23: #{tpu_custom_call.1} parent=19 // pred_region
          %s109 = smul.u32 16, %s11
          %p110 = scmp.lt.s32.totalorder %s109, 31
          %s111 = scalar_select %p110, %s109, 31
          %s112 = smul.addr %s111, 8
          %s113 = scalar_lea.vmem %s0, %s112
          %s114 = smul.u32 16, %s11
        $region24: #{tpu_custom_call.1} parent=19 // pred_fallthru
          _
      $region20: #{tpu_custom_call.1} parent=5 // pred_fallthru
        _
      %p115 = scmp.le.s32.totalorder 1, %s11
      %p116 = scmp.lt.s32.totalorder %s11, 3
      %p117 = pnand %p115, %p116
      %p118 = pneg %p117
      // Predicated region
      $region25: #{tpu_custom_call.1} parent=5 // pred_check
        _
      $region26: #{tpu_custom_call.1} parent=5 // pred_check_branch
        %120 = sbr.rel (%p117) target = $region28
      $region27: #{tpu_custom_call.1} parent=5 // pred_region
        %s121 = ssub.s32 %s11, 1
        %s122 = smul.u32 16, %s16
        %p123 = scmp.lt.s32.totalorder %s122, 31
        %s124 = scalar_select %p123, %s122, 31
        %s125 = smul.addr %s124, 8
        %s126 = scalar_lea.vmem %s0, %s125
        %p127 = pneg %p37
        %p128 = pneg %p34
        %p129 = pneg %p58
        %p130 = pneg %p55
        %p131 = pneg %p84
        %p132 = pneg %p81
        %s133 = sand.u32 %s71, 1
        %s134 = scalar_lea.sflag [#allocation3], %s133
        %s135 = sand.u32 %s71, 1
        %s136 = smul.addr %s135, 128
        %s137 = scalar_lea.vmem [#allocation2], %s136
        %s138 = smul.u32 16, %s16
        %p139 = scmp.lt.s32.totalorder %s138, 31
        %s140 = scalar_select %p139, %s138, 31
        %s141 = smul.addr %s140, 8
        %s142 = scalar_lea.vmem %s0, %s141
        %s143 = smul.u32 16, %s16
        %s144 = smul.u32 16, %s16
        %v145 = vld [vmem:[%s142] sm:$0xff]
        %v146 = vld [vmem:[%s142 + $0x8] sm:$0xff]
        %v147 = vld [vmem:[%s142 + $0x10] sm:$0xff]
        %v148 = vld [vmem:[%s142 + $0x18] sm:$0xff]
        %v149 = vld [vmem:[%s142 + $0x20] sm:$0xff]
        %v150 = vld [vmem:[%s142 + $0x28] sm:$0xff]
        %v151 = vld [vmem:[%s142 + $0x30] sm:$0xff]
        %v152 = vld [vmem:[%s142 + $0x38] sm:$0xff]
        %v153 = vld [vmem:[%s142 + $0x40] sm:$0xff]
        %v154 = vld [vmem:[%s142 + $0x48] sm:$0xff]
        %v155 = vld [vmem:[%s142 + $0x50] sm:$0xff]
        %v156 = vld [vmem:[%s142 + $0x58] sm:$0xff]
        %v157 = vld [vmem:[%s142 + $0x60] sm:$0xff]
        %v158 = vld [vmem:[%s142 + $0x68] sm:$0xff]
        %v159 = vld [vmem:[%s142 + $0x70] sm:$0xff]
        %v160 = vld [vmem:[%s142 + $0x78] sm:$0xff]
        %v161 = vld [vmem:[%s1] sm:$0xff]
        %v162 = vld [vmem:[%s1 + $0x8] sm:$0xff]
        %v163 = vld [vmem:[%s1 + $0x10] sm:$0xff]
        %v164 = vld [vmem:[%s1 + $0x18] sm:$0xff]
        %v165 = vld [vmem:[%s1 + $0x20] sm:$0xff]
        %v166 = vld [vmem:[%s1 + $0x28] sm:$0xff]
        %v167 = vld [vmem:[%s1 + $0x30] sm:$0xff]
        %v168 = vld [vmem:[%s1 + $0x38] sm:$0xff]
        %vm169 = vcmask 523264
        %v171 = vsel %vm169, %v145, 0
        %v174 = vsel %vm169, %v146, 0
        %v177 = vsel %vm169, %v147, 0
        %v180 = vsel %vm169, %v148, 0
        %v183 = vsel %vm169, %v149, 0
        %v186 = vsel %vm169, %v150, 0
        %v189 = vsel %vm169, %v151, 0
        %v192 = vsel %vm169, %v152, 0
        %v195 = vsel %vm169, %v153, 0
        %v198 = vsel %vm169, %v154, 0
        %v201 = vsel %vm169, %v155, 0
        %v204 = vsel %vm169, %v156, 0
        %v207 = vsel %vm169, %v157, 0
        %v210 = vsel %vm169, %v158, 0
        %v213 = vsel %vm169, %v159, 0
        %v216 = vsel %vm169, %v160, 0
        %218 = vmatprep.subr.mxu0 0.0
        %219 = vmatpush1.msra.mxu0 %v161
        %220 = vmatprep.subr.mxu0 0.0
        %221 = vmatpush1.msra.mxu0 %v162
        %222 = vmatprep.subr.mxu0 0.0
        %223 = vmatpush1.msra.mxu0 %v163
        %224 = vmatprep.subr.mxu0 0.0
        %225 = vmatpush1.msra.mxu0 %v164
        %226 = vmatprep.subr.mxu0 0.0
        %227 = vmatpush1.msra.mxu0 %v165
        %228 = vmatprep.subr.mxu0 0.0
        %229 = vmatpush1.msra.mxu0 %v166
        %230 = vmatprep.subr.mxu0 0.0
        %231 = vmatpush1.msra.mxu0 %v167
        %232 = vmatprep.subr.mxu0 0.0
        %233 = vmatpush1.msra.mxu0 %v168
        %234 = vmatprep.subr.mxu0 0.0
        %235 = vmatpush1.msra.mxu0 0.0
        %236 = vmatprep.subr.mxu0 0.0
        %237 = vmatpush1.msra.mxu0 0.0
        %238 = vmatprep.subr.mxu0 0.0
        %239 = vmatpush1.msra.mxu0 0.0
        %240 = vmatprep.subr.mxu0 0.0
        %241 = vmatpush1.msra.mxu0 0.0
        %242 = vmatprep.subr.mxu0 0.0
        %243 = vmatpush1.msra.mxu0 0.0
        %244 = vmatprep.subr.mxu0 0.0
        %245 = vmatpush1.msra.mxu0 0.0
        %246 = vmatprep.subr.mxu0 0.0
        %247 = vmatpush1.msra.mxu0 0.0
        %248 = vmatprep.subr.mxu0 0.0
        %249 = vmatpush1.msra.mxu0 0.0
        %250 = vmatprep.subr.mxu0 0.0
        %251 = vmatpush1.msra.mxu0 0.0
        %252 = vmatprep.subr.mxu0 0.0
        %253 = vmatpush1.msra.mxu0 0.0
        %254 = vmatprep.subr.mxu0 0.0
        %255 = vmatpush1.msra.mxu0 0.0
        %256 = vmatprep.subr.mxu0 0.0
        %257 = vmatpush1.msra.mxu0 0.0
        %258 = vmatprep.subr.mxu0 0.0
        %259 = vmatpush1.msra.mxu0 0.0
        %260 = vmatprep.subr.mxu0 0.0
        %261 = vmatpush1.msra.mxu0 0.0
        %262 = vmatprep.subr.mxu0 0.0
        %263 = vmatpush1.msra.mxu0 0.0
        %264 = vmatprep.subr.mxu0 0.0
        %265 = vmatpush1.msra.mxu0 0.0
        %266 = vmatprep.subr.mxu0 0.0
        %267 = vmatpush1.msra.mxu0 0.0
        %268 = vmatprep.subr.mxu0 0.0
        %269 = vmatpush1.msra.mxu0 0.0
        %270 = vmatprep.subr.mxu0 0.0
        %271 = vmatpush1.msra.mxu0 0.0
        %272 = vmatprep.subr.mxu0 0.0
        %273 = vmatpush1.msra.mxu0 0.0
        %274 = vmatprep.subr.mxu0 0.0
        %275 = vmatpush1.msra.mxu0 0.0
        %276 = vmatprep.subr.mxu0 0.0
        %277 = vmatpush1.msra.mxu0 0.0
        %278 = vmatprep.subr.mxu0 0.0
        %279 = vmatpush1.msra.mxu0 0.0
        %280 = vmatprep.subr.mxu0 0.0
        %281 = vmatpush1.msra.mxu0 0.0
        %282 = vmatprep.mubr.f32.mxu0 0.0
        %283 = vmatmul.mubr.f32.gmra.mrb[0].mxu0 %v171
        %v284 = vpop.f32.mrb[0].mxu0
        %v285 = vadd.f32 0.0, %v284
        %v286 = vpop.f32.mrb[0].mxu0
        %287 = vmatprep.mubr.f32.mxu0 0.0
        %288 = vmatmul.mubr.f32.gmra.mrb[0].mxu0 %v174
        %v289 = vpop.f32.mrb[0].mxu0
        %v290 = vadd.f32 0.0, %v289
        %v291 = vpop.f32.mrb[0].mxu0
        %292 = vmatprep.mubr.f32.mxu0 0.0
        %293 = vmatmul.mubr.f32.gmra.mrb[0].mxu0 %v177
        %v294 = vpop.f32.mrb[0].mxu0
        %v295 = vadd.f32 0.0, %v294
        %v296 = vpop.f32.mrb[0].mxu0
        %297 = vmatprep.mubr.f32.mxu0 0.0
        %298 = vmatmul.mubr.f32.gmra.mrb[0].mxu0 %v180
        %v299 = vpop.f32.mrb[0].mxu0
        %v300 = vadd.f32 0.0, %v299
        %v301 = vpop.f32.mrb[0].mxu0
        %302 = vmatprep.mubr.f32.mxu0 0.0
        %303 = vmatmul.mubr.f32.gmra.mrb[0].mxu0 %v183
        %v304 = vpop.f32.mrb[0].mxu0
        %v305 = vadd.f32 0.0, %v304
        %v306 = vpop.f32.mrb[0].mxu0
        %307 = vmatprep.mubr.f32.mxu0 0.0
        %308 = vmatmul.mubr.f32.gmra.mrb[0].mxu0 %v186
        %v309 = vpop.f32.mrb[0].mxu0
        %v310 = vadd.f32 0.0, %v309
        %v311 = vpop.f32.mrb[0].mxu0
        %312 = vmatprep.mubr.f32.mxu0 0.0
        %313 = vmatmul.mubr.f32.gmra.mrb[0].mxu0 %v189
        %v314 = vpop.f32.mrb[0].mxu0
        %v315 = vadd.f32 0.0, %v314
        %v316 = vpop.f32.mrb[0].mxu0
        %317 = vmatprep.mubr.f32.mxu0 0.0
        %318 = vmatmul.mubr.f32.gmra.mrb[0].mxu0 %v192
        %v319 = vpop.f32.mrb[0].mxu0
        %v320 = vadd.f32 0.0, %v319
        %v321 = vpop.f32.mrb[0].mxu0
        %322 = vmatprep.mubr.f32.mxu0 0.0
        %323 = vmatmul.mubr.f32.gmra.mrb[0].mxu0 %v195
        %v324 = vpop.f32.mrb[0].mxu0
        %v325 = vadd.f32 0.0, %v324
        %v326 = vpop.f32.mrb[0].mxu0
        %327 = vmatprep.mubr.f32.mxu0 0.0
        %328 = vmatmul.mubr.f32.gmra.mrb[0].mxu0 %v198
        %v329 = vpop.f32.mrb[0].mxu0
        %v330 = vadd.f32 0.0, %v329
        %v331 = vpop.f32.mrb[0].mxu0
        %332 = vmatprep.mubr.f32.mxu0 0.0
        %333 = vmatmul.mubr.f32.gmra.mrb[0].mxu0 %v201
        %v334 = vpop.f32.mrb[0].mxu0
        %v335 = vadd.f32 0.0, %v334
        %v336 = vpop.f32.mrb[0].mxu0
        %337 = vmatprep.mubr.f32.mxu0 0.0
        %338 = vmatmul.mubr.f32.gmra.mrb[0].mxu0 %v204
        %v339 = vpop.f32.mrb[0].mxu0
        %v340 = vadd.f32 0.0, %v339
        %v341 = vpop.f32.mrb[0].mxu0
        %342 = vmatprep.mubr.f32.mxu0 0.0
        %343 = vmatmul.mubr.f32.gmra.mrb[0].mxu0 %v207
        %v344 = vpop.f32.mrb[0].mxu0
        %v345 = vadd.f32 0.0, %v344
        %v346 = vpop.f32.mrb[0].mxu0
        %347 = vmatprep.mubr.f32.mxu0 0.0
        %348 = vmatmul.mubr.f32.gmra.mrb[0].mxu0 %v210
        %v349 = vpop.f32.mrb[0].mxu0
        %v350 = vadd.f32 0.0, %v349
        %v351 = vpop.f32.mrb[0].mxu0
        %352 = vmatprep.mubr.f32.mxu0 0.0
        %353 = vmatmul.mubr.f32.gmra.mrb[0].mxu0 %v213
        %v354 = vpop.f32.mrb[0].mxu0
        %v355 = vadd.f32 0.0, %v354
        %v356 = vpop.f32.mrb[0].mxu0
        %357 = vmatprep.mubr.f32.mxu0 0.0
        %358 = vmatmul.mubr.f32.gmra.mrb[0].mxu0 %v216
        %v359 = vpop.f32.mrb[0].mxu0
        %v360 = vadd.f32 0.0, %v359
        %v361 = vpop.f32.mrb[0].mxu0
        %362 = vdwg.mxu0
        %363 = vst [vmem:[%s137] sm:$0xff] %v285
        %364 = vst [vmem:[%s137 + $0x8] sm:$0xff] %v290
        %365 = vst [vmem:[%s137 + $0x10] sm:$0xff] %v295
        %366 = vst [vmem:[%s137 + $0x18] sm:$0xff] %v300
        %367 = vst [vmem:[%s137 + $0x20] sm:$0xff] %v305
        %368 = vst [vmem:[%s137 + $0x28] sm:$0xff] %v310
        %369 = vst [vmem:[%s137 + $0x30] sm:$0xff] %v315
        %370 = vst [vmem:[%s137 + $0x38] sm:$0xff] %v320
        %371 = vst [vmem:[%s137 + $0x40] sm:$0xff] %v325
        %372 = vst [vmem:[%s137 + $0x48] sm:$0xff] %v330
        %373 = vst [vmem:[%s137 + $0x50] sm:$0xff] %v335
        %374 = vst [vmem:[%s137 + $0x58] sm:$0xff] %v340
        %375 = vst [vmem:[%s137 + $0x60] sm:$0xff] %v345
        %376 = vst [vmem:[%s137 + $0x68] sm:$0xff] %v350
        %377 = vst [vmem:[%s137 + $0x70] sm:$0xff] %v355
        %378 = vst [vmem:[%s137 + $0x78] sm:$0xff] %v360
        %s379 = sand.u32 %s71, 1
        %s380 = scalar_lea.sflag [#allocation3], %s379
        %s381 = sand.u32 %s71, 1
        %s382 = smul.addr %s381, 128
        %s383 = scalar_lea.vmem [#allocation2], %s382
        // Predicated region
        $region29: #{tpu_custom_call.1} parent=27 // pred_check
          %p384 = pneg %p81
        $region30: #{tpu_custom_call.1} parent=27 // pred_check_branch
          %386 = sbr.rel (%p384) target = $region32
        $region31: #{tpu_custom_call.1} parent=27 // pred_region
          %s387 = smul.u32 16, %s16
          %s389 = ssub.s32 2048, 2048
          %390 = vsyncadd %s380, %s389
          %s391 = smul.addr %s387, 128
          %s392 = scalar_lea.hbm %s2, %s391
          %s393 = sshll.u32 %s383, 4
          %s394 = int_to_ptr.vmem [resolvable:$true] %s393
          %399 = dma.vmem_to_hbm [thread:$0]  %s394, 2048, %s392, %s380, 128, 128, 8
        $region32: #{tpu_custom_call.1} parent=27 // pred_fallthru
          _
      $region28: #{tpu_custom_call.1} parent=5 // pred_fallthru
        _
      %p400 = scmp.le.s32.totalorder 2, %s11
      // Predicated region
      $region33: #{tpu_custom_call.1} parent=5 // pred_check
        %p401 = pneg %p400
      $region34: #{tpu_custom_call.1} parent=5 // pred_check_branch
        %403 = sbr.rel (%p401) target = $region36
      $region35: #{tpu_custom_call.1} parent=5 // pred_region
        %s404 = ssub.s32 %s11, 2
        // Predicated region
        $region37: #{tpu_custom_call.1} parent=35 // pred_check
          %p405 = pneg %p87
        $region38: #{tpu_custom_call.1} parent=35 // pred_check_branch
          %407 = sbr.rel (%p405) target = $region40
        $region39: #{tpu_custom_call.1} parent=35 // pred_region
          %s408 = sand.u32 %s72, 1
          %s409 = scalar_lea.sflag [#allocation3], %s408
          %s410 = sand.u32 %s72, 1
          %s411 = smul.addr %s410, 128
          %s412 = scalar_lea.vmem [#allocation2], %s411
          %413 = dma.done %s409, 2048
        $region40: #{tpu_custom_call.1} parent=35 // pred_fallthru
          _
      $region36: #{tpu_custom_call.1} parent=5 // pred_fallthru
        _
    $region6: #{tpu_custom_call.1} parent=1 // loop_footer
      %s15 = sadd.s32 1, %s11
    $region7: #{tpu_custom_call.1} parent=1 // loop_footer_branch
      %10 = sbr.rel target = $region3
    $region8: #{tpu_custom_call.1} parent=1 // loop_exit
      _
    %414 = vsyncpa [#allocation3], 1
    %s415 = scalar_lea.sflag [#allocation3], 1
    %416 = vsyncpa %s415, 1

</llo_original>
